<compile_context>
chip_gen: v6e
topology: v6e:2x2x1
jax: 0.10.0
libtpu: 0.0.40
codegen_flags: <defaults>
</compile_context>

<pallas_src>
import functools

import jax
import jax.numpy as jnp
from jax.experimental import pallas as pl
from jax.experimental.pallas import tpu as pltpu


def _round_up(x, m):
    return (x + m - 1) // m * m


def _maxpool2x2_rowpair_kernel(x_ref, o_ref, *, W, Wo):
    # x_ref: (R, 2*W) tile; lanes [0:W) = image row 2h, lanes [W:2W) = image row 2h+1.
    x = x_ref[...]
    # (1) H-pair max first: elementwise VPU max of two contiguous lane slices.
    h = jnp.maximum(x[:, :W], x[:, W:])                          # (R, W)
    # (2) W-pair max + lane compaction on the already-halved data.
    o_ref[...] = jnp.max(h.reshape(h.shape[0], Wo, 2), axis=2)   # (R, Wo)


def downsample_block(x, *, target_stage_bytes=4 * 1024 * 1024):
    """MaxPool2d((2,2), stride=2, dilation=1, ceil_mode=False) on NCHW input.

    DownSampleBlock default p=0.0 -> no dropout child, so this is the whole forward pass.
    Odd trailing spatial rows/cols are dropped (floor), matching ceil_mode=False.
    """
    N, C, H, W0 = x.shape
    Ho, Wo = H // 2, W0 // 2
    assert Ho > 0 and Wo > 0, "spatial dims must be >= 2 for a 2x2 / stride-2 pool"
    # Floor-crop for odd spatial dims (identity when already even).
    x = x[:, :, : 2 * Ho, : 2 * Wo]
    W = 2 * Wo
    R_total = N * C * Ho                      # one row per vertical pooling pair

    # Free, contiguous relayout: each row holds one vertical pooling pair of one plane.
    x_rows = x.reshape(R_total, 2 * W)

    # Rows per grid step: sized from VMEM-padded bytes per row (lane dim pads to 128) so
    # one pipeline stage (input + output tile) is ~target_stage_bytes; the double-buffered
    # footprint stays well under VMEM on all TPU generations.  Sublane multiple follows the
    # dtype packing (8 for 4-byte, 16 for 2-byte, 32 for 1-byte elements).
    itemsize = x.dtype.itemsize
    sub = max(8, 32 // max(1, itemsize))
    row_bytes = (_round_up(2 * W, 128) + _round_up(Wo, 128)) * itemsize
    R = max(sub, (target_stage_bytes // row_bytes) // sub * sub)
    if R >= R_total:
        R = R_total                            # full extent is always a legal block dim

    kernel = functools.partial(_maxpool2x2_rowpair_kernel, W=W, Wo=Wo)

    cost = pl.CostEstimate(
        flops=3 * R_total * Wo,                # 3 comparisons per output element
        transcendentals=0,
        bytes_accessed=(R_total * 2 * W + R_total * Wo) * itemsize,
    )

    out = pl.pallas_call(
        kernel,
        out_shape=jax.ShapeDtypeStruct((R_total, Wo), x.dtype),
        grid=(pl.cdiv(R_total, R),),
        in_specs=[pl.BlockSpec((R, 2 * W), lambda i: (i, 0))],
        out_specs=pl.BlockSpec((R, Wo), lambda i: (i, 0)),
        compiler_params=pltpu.CompilerParams(
            dimension_semantics=("parallel",),
            vmem_limit_bytes=48 * 1024 * 1024,
        ),
        cost_estimate=cost,
    )(x_rows)

    return out.reshape(N, C, Ho, Wo)


if __name__ == "__main__":
    key = jax.random.PRNGKey(0)
    N, C, H, W = 2, 4, 16, 16
    x = jax.random.normal(key, (N, C, H, W), dtype=jnp.float32)

    y = jax.block_until_ready(downsample_block(x))

    # Reference: identical semantics to nn.MaxPool2d((2,2), stride=2, ceil_mode=False).
    ref = jnp.max(x.reshape(N, C, H // 2, 2, W // 2, 2), axis=(3, 5))
    assert y.shape == (N, C, H // 2, W // 2)
    assert jnp.allclose(y, ref), "mismatch vs reference max-pool"

    print("KERNEL_OK")
</pallas_src>

<mosaic_0001>
module attributes {stable_mosaic.version = 11 : i64} {
  func.func @_maxpool2x2_rowpair_kernel(%arg0: i32, %arg1: memref<64x32xf32, #tpu.memory_space<vmem>>, %arg2: memref<64x8xf32, #tpu.memory_space<vmem>>) attributes {dimension_semantics = [#tpu.dimension_semantics<parallel>], iteration_bounds = array<i64: 1>, scalar_prefetch = 0 : i64, scratch_operands = 0 : i64, tpu.core_type = #tpu.core_type<tc>, window_params = [{transform_indices = @transform_0, window_bounds = array<i64: 64, 32>}, {transform_indices = @transform_1, window_bounds = array<i64: 64, 8>}]} {
    %c0 = arith.constant 0 : index
    %c0_0 = arith.constant 0 : index
    %0 = vector.load %arg1[%c0, %c0_0] : memref<64x32xf32, #tpu.memory_space<vmem>>, vector<64x32xf32>
    %1 = vector.extract_strided_slice %0 {offsets = [0, 0], sizes = [64, 16], strides = [1, 1]} : vector<64x32xf32> to vector<64x16xf32>
    %2 = vector.extract_strided_slice %0 {offsets = [0, 16], sizes = [64, 16], strides = [1, 1]} : vector<64x32xf32> to vector<64x16xf32>
    %3 = arith.maximumf %1, %2 : vector<64x16xf32>
    %4 = vector.shape_cast %3 : vector<64x16xf32> to vector<64x8x2xf32>
    %cst = arith.constant dense<0xFF800000> : vector<64x8xf32>
    %5 = vector.multi_reduction <maximumf>, %4, %cst [2] : vector<64x8x2xf32> to vector<64x8xf32>
    %c0_1 = arith.constant 0 : index
    %c0_2 = arith.constant 0 : index
    %6 = vector.load %arg2[%c0_1, %c0_2] : memref<64x8xf32, #tpu.memory_space<vmem>>, vector<64x8xf32>
    tpu.vector_store %arg2[%c0_1, %c0_2], %5 {strides = array<i32>} : memref<64x8xf32, #tpu.memory_space<vmem>>, vector<64x8xf32>,
    return
  }
  func.func @transform_0(%arg0: i32) -> (i32, i32) {
    %c0_i32 = arith.constant 0 : i32
    %c0_i32_0 = arith.constant 0 : i32
    return %arg0, %c0_i32 : i32, i32
  }
  func.func @transform_1(%arg0: i32) -> (i32, i32) {
    %c0_i32 = arith.constant 0 : i32
    %c0_i32_0 = arith.constant 0 : i32
    return %arg0, %c0_i32 : i32, i32
  }
}

</mosaic_0001>

<llo_original>
// kernel: tpu_custom_call.1
$region0: #{tpu_custom_call.1}
  #allocation0 [shape = 'u32[]', space=smem, size = 0x4, offset = 0x4, fixed_abs, tag = 'smem constant byte address 0x4 - core index']
  #allocation1 [shape = 'u32[144,128]{1,0:T(1,128)}', space=vmem, size = 0x12000, scoped, tag = 'internal scratch']
  %s0 = inlined_call_operand.vmem [shape: f32[64,32], index: 0, kind: input, shape index: {}]
  %s1 = inlined_call_operand.vmem [shape: f32[64,8], index: 1, kind: output, shape index: {}]
  %s2 = sld [smem:[#allocation0]]
  $region14: #{tpu_custom_call.1} parent=0
    _
  %s4 = ssub.s32 1, %s2
  %s5 = scalar_select 0, %s4, %s2
  // Predicated region
  $region2: #{tpu_custom_call.1} parent=0 // pred_check
    _
  $region3: #{tpu_custom_call.1} parent=0 // pred_check_branch
    %7 = sbr.rel (0) target = $region5
  $region4: #{tpu_custom_call.1} parent=0 // pred_region
    _
  $region5: #{tpu_custom_call.1} parent=0 // pred_fallthru
    _
  %v8 = vld [vmem:[%s0] sm:$0xff]
  %v9 = vld [vmem:[%s0 + $0x8] sm:$0xff]
  %v10 = vld [vmem:[%s0 + $0x10] sm:$0xff]
  %v11 = vld [vmem:[%s0 + $0x18] sm:$0xff]
  %v12 = vld [vmem:[%s0 + $0x20] sm:$0xff]
  %v13 = vld [vmem:[%s0 + $0x28] sm:$0xff]
  %v14 = vld [vmem:[%s0 + $0x30] sm:$0xff]
  %v15 = vld [vmem:[%s0 + $0x38] sm:$0xff]
  %24 = vrot.lane.b32.xlu0 %v8, 112
  %v25 = vpop.permute.xlu0 %24
  %26 = vrot.lane.b32.xlu0 %v9, 112
  %v27 = vpop.permute.xlu0 %26
  %28 = vrot.lane.b32.xlu0 %v10, 112
  %v29 = vpop.permute.xlu0 %28
  %30 = vrot.lane.b32.xlu0 %v11, 112
  %v31 = vpop.permute.xlu0 %30
  %32 = vrot.lane.b32.xlu0 %v12, 112
  %v33 = vpop.permute.xlu0 %32
  %34 = vrot.lane.b32.xlu0 %v13, 112
  %v35 = vpop.permute.xlu0 %34
  %36 = vrot.lane.b32.xlu0 %v14, 112
  %v37 = vpop.permute.xlu0 %36
  %38 = vrot.lane.b32.xlu0 %v15, 112
  %v39 = vpop.permute.xlu0 %38
  %v48 = vmax.f32 %v8, %v25
  %v49 = vmax.f32 %v9, %v27
  %v50 = vmax.f32 %v10, %v29
  %v51 = vmax.f32 %v11, %v31
  %v52 = vmax.f32 %v12, %v33
  %v53 = vmax.f32 %v13, %v35
  %v54 = vmax.f32 %v14, %v37
  %v55 = vmax.f32 %v15, %v39
  %64 = vrot.lane.b32.xlu0 %v48, 126
  %v65 = vpop.permute.xlu0 %64
  %66 = vrot.lane.b32.xlu0 %v49, 126
  %v67 = vpop.permute.xlu0 %66
  %68 = vrot.lane.b32.xlu0 %v50, 126
  %v69 = vpop.permute.xlu0 %68
  %70 = vrot.lane.b32.xlu0 %v51, 126
  %v71 = vpop.permute.xlu0 %70
  %72 = vrot.lane.b32.xlu0 %v52, 126
  %v73 = vpop.permute.xlu0 %72
  %74 = vrot.lane.b32.xlu0 %v53, 126
  %v75 = vpop.permute.xlu0 %74
  %76 = vrot.lane.b32.xlu0 %v54, 126
  %v77 = vpop.permute.xlu0 %76
  %78 = vrot.lane.b32.xlu0 %v55, 126
  %v79 = vpop.permute.xlu0 %78
  %88 = vrot.lane.b32.xlu0 %v48, 124
  %v89 = vpop.permute.xlu0 %88
  %90 = vrot.lane.b32.xlu0 %v49, 124
  %v91 = vpop.permute.xlu0 %90
  %92 = vrot.lane.b32.xlu0 %v50, 124
  %v93 = vpop.permute.xlu0 %92
  %94 = vrot.lane.b32.xlu0 %v51, 124
  %v95 = vpop.permute.xlu0 %94
  %96 = vrot.lane.b32.xlu0 %v52, 124
  %v97 = vpop.permute.xlu0 %96
  %98 = vrot.lane.b32.xlu0 %v53, 124
  %v99 = vpop.permute.xlu0 %98
  %100 = vrot.lane.b32.xlu0 %v54, 124
  %v101 = vpop.permute.xlu0 %100
  %102 = vrot.lane.b32.xlu0 %v55, 124
  %v103 = vpop.permute.xlu0 %102
  %112 = vrot.lane.b32.xlu0 %v48, 122
  %v113 = vpop.permute.xlu0 %112
  %114 = vrot.lane.b32.xlu0 %v49, 122
  %v115 = vpop.permute.xlu0 %114
  %116 = vrot.lane.b32.xlu0 %v50, 122
  %v117 = vpop.permute.xlu0 %116
  %118 = vrot.lane.b32.xlu0 %v51, 122
  %v119 = vpop.permute.xlu0 %118
  %120 = vrot.lane.b32.xlu0 %v52, 122
  %v121 = vpop.permute.xlu0 %120
  %122 = vrot.lane.b32.xlu0 %v53, 122
  %v123 = vpop.permute.xlu0 %122
  %124 = vrot.lane.b32.xlu0 %v54, 122
  %v125 = vpop.permute.xlu0 %124
  %126 = vrot.lane.b32.xlu0 %v55, 122
  %v127 = vpop.permute.xlu0 %126
  %136 = vrot.lane.b32.xlu0 %v48, 120
  %v137 = vpop.permute.xlu0 %136
  %138 = vrot.lane.b32.xlu0 %v49, 120
  %v139 = vpop.permute.xlu0 %138
  %140 = vrot.lane.b32.xlu0 %v50, 120
  %v141 = vpop.permute.xlu0 %140
  %142 = vrot.lane.b32.xlu0 %v51, 120
  %v143 = vpop.permute.xlu0 %142
  %144 = vrot.lane.b32.xlu0 %v52, 120
  %v145 = vpop.permute.xlu0 %144
  %146 = vrot.lane.b32.xlu0 %v53, 120
  %v147 = vpop.permute.xlu0 %146
  %148 = vrot.lane.b32.xlu0 %v54, 120
  %v149 = vpop.permute.xlu0 %148
  %150 = vrot.lane.b32.xlu0 %v55, 120
  %v151 = vpop.permute.xlu0 %150
  %160 = vrot.lane.b32.xlu0 %v48, 118
  %v161 = vpop.permute.xlu0 %160
  %162 = vrot.lane.b32.xlu0 %v49, 118
  %v163 = vpop.permute.xlu0 %162
  %164 = vrot.lane.b32.xlu0 %v50, 118
  %v165 = vpop.permute.xlu0 %164
  %166 = vrot.lane.b32.xlu0 %v51, 118
  %v167 = vpop.permute.xlu0 %166
  %168 = vrot.lane.b32.xlu0 %v52, 118
  %v169 = vpop.permute.xlu0 %168
  %170 = vrot.lane.b32.xlu0 %v53, 118
  %v171 = vpop.permute.xlu0 %170
  %172 = vrot.lane.b32.xlu0 %v54, 118
  %v173 = vpop.permute.xlu0 %172
  %174 = vrot.lane.b32.xlu0 %v55, 118
  %v175 = vpop.permute.xlu0 %174
  %184 = vrot.lane.b32.xlu0 %v48, 116
  %v185 = vpop.permute.xlu0 %184
  %186 = vrot.lane.b32.xlu0 %v49, 116
  %v187 = vpop.permute.xlu0 %186
  %188 = vrot.lane.b32.xlu0 %v50, 116
  %v189 = vpop.permute.xlu0 %188
  %190 = vrot.lane.b32.xlu0 %v51, 116
  %v191 = vpop.permute.xlu0 %190
  %192 = vrot.lane.b32.xlu0 %v52, 116
  %v193 = vpop.permute.xlu0 %192
  %194 = vrot.lane.b32.xlu0 %v53, 116
  %v195 = vpop.permute.xlu0 %194
  %196 = vrot.lane.b32.xlu0 %v54, 116
  %v197 = vpop.permute.xlu0 %196
  %198 = vrot.lane.b32.xlu0 %v55, 116
  %v199 = vpop.permute.xlu0 %198
  %208 = vrot.lane.b32.xlu0 %v48, 114
  %v209 = vpop.permute.xlu0 %208
  %210 = vrot.lane.b32.xlu0 %v49, 114
  %v211 = vpop.permute.xlu0 %210
  %212 = vrot.lane.b32.xlu0 %v50, 114
  %v213 = vpop.permute.xlu0 %212
  %214 = vrot.lane.b32.xlu0 %v51, 114
  %v215 = vpop.permute.xlu0 %214
  %216 = vrot.lane.b32.xlu0 %v52, 114
  %v217 = vpop.permute.xlu0 %216
  %218 = vrot.lane.b32.xlu0 %v53, 114
  %v219 = vpop.permute.xlu0 %218
  %220 = vrot.lane.b32.xlu0 %v54, 114
  %v221 = vpop.permute.xlu0 %220
  %222 = vrot.lane.b32.xlu0 %v55, 114
  %v223 = vpop.permute.xlu0 %222
  %v232 = vcombine.low %v48, %v89
  %v233 = vcombine.high %v48, %v89
  %v235 = vunpack.c.l.s4 1983009808
  %v236 = vunpack.c.0.s8 %v235
  %v237 = vlaneseq
  %v238 = vshrl.u32 %v237, 7
  %v239 = vsub.s32 %v236, %v238
  %v240 = vrot.slane %v232, %v239
  %v242 = vunpack.c.l.s4 1983009808
  %v243 = vunpack.c.0.s8 %v242
  %v244 = vlaneseq
  %v245 = vshrl.u32 %v244, 7
  %v246 = vsub.s32 %v243, %v245
  %v247 = vrot.slane %v233, %v246
  %v248 = vcombine.low %v65, %v113
  %v249 = vcombine.high %v65, %v113
  %v251 = vunpack.c.l.s4 1983009808
  %v252 = vunpack.c.0.s8 %v251
  %v253 = vlaneseq
  %v254 = vshrl.u32 %v253, 7
  %v255 = vsub.s32 %v252, %v254
  %v256 = vrot.slane %v248, %v255
  %v258 = vunpack.c.l.s4 1983009808
  %v259 = vunpack.c.0.s8 %v258
  %v260 = vlaneseq
  %v261 = vshrl.u32 %v260, 7
  %v262 = vsub.s32 %v259, %v261
  %v263 = vrot.slane %v249, %v262
  %v264 = vcombine.low %v137, %v185
  %v265 = vcombine.high %v137, %v185
  %v267 = vunpack.c.l.s4 1983009808
  %v268 = vunpack.c.0.s8 %v267
  %v269 = vlaneseq
  %v270 = vshrl.u32 %v269, 7
  %v271 = vsub.s32 %v268, %v270
  %v272 = vrot.slane %v264, %v271
  %v274 = vunpack.c.l.s4 1983009808
  %v275 = vunpack.c.0.s8 %v274
  %v276 = vlaneseq
  %v277 = vshrl.u32 %v276, 7
  %v278 = vsub.s32 %v275, %v277
  %v279 = vrot.slane %v265, %v278
  %v280 = vcombine.low %v161, %v209
  %v281 = vcombine.high %v161, %v209
  %v283 = vunpack.c.l.s4 1983009808
  %v284 = vunpack.c.0.s8 %v283
  %v285 = vlaneseq
  %v286 = vshrl.u32 %v285, 7
  %v287 = vsub.s32 %v284, %v286
  %v288 = vrot.slane %v280, %v287
  %v290 = vunpack.c.l.s4 1983009808
  %v291 = vunpack.c.0.s8 %v290
  %v292 = vlaneseq
  %v293 = vshrl.u32 %v292, 7
  %v294 = vsub.s32 %v291, %v293
  %v295 = vrot.slane %v281, %v294
  %v296 = vcombine.low %v240, %v256
  %v297 = vcombine.high %v240, %v256
  %v299 = vunpack.c.l.s4 1934713408
  %v300 = vunpack.c.0.s8 %v299
  %v301 = vlaneseq
  %v302 = vshrl.u32 %v301, 7
  %v303 = vsub.s32 %v300, %v302
  %v304 = vrot.slane %v296, %v303
  %v306 = vunpack.c.l.s4 1934713408
  %v307 = vunpack.c.0.s8 %v306
  %v308 = vlaneseq
  %v309 = vshrl.u32 %v308, 7
  %v310 = vsub.s32 %v307, %v309
  %v311 = vrot.slane %v297, %v310
  %v312 = vcombine.low %v247, %v263
  %v313 = vcombine.high %v247, %v263
  %v315 = vunpack.c.l.s4 1934713408
  %v316 = vunpack.c.0.s8 %v315
  %v317 = vlaneseq
  %v318 = vshrl.u32 %v317, 7
  %v319 = vsub.s32 %v316, %v318
  %v320 = vrot.slane %v312, %v319
  %v322 = vunpack.c.l.s4 1934713408
  %v323 = vunpack.c.0.s8 %v322
  %v324 = vlaneseq
  %v325 = vshrl.u32 %v324, 7
  %v326 = vsub.s32 %v323, %v325
  %v327 = vrot.slane %v313, %v326
  %v328 = vcombine.low %v272, %v288
  %v329 = vcombine.high %v272, %v288
  %v331 = vunpack.c.l.s4 1934713408
  %v332 = vunpack.c.0.s8 %v331
  %v333 = vlaneseq
  %v334 = vshrl.u32 %v333, 7
  %v335 = vsub.s32 %v332, %v334
  %v336 = vrot.slane %v328, %v335
  %v338 = vunpack.c.l.s4 1934713408
  %v339 = vunpack.c.0.s8 %v338
  %v340 = vlaneseq
  %v341 = vshrl.u32 %v340, 7
  %v342 = vsub.s32 %v339, %v341
  %v343 = vrot.slane %v329, %v342
  %v344 = vcombine.low %v279, %v295
  %v345 = vcombine.high %v279, %v295
  %v347 = vunpack.c.l.s4 1934713408
  %v348 = vunpack.c.0.s8 %v347
  %v349 = vlaneseq
  %v350 = vshrl.u32 %v349, 7
  %v351 = vsub.s32 %v348, %v350
  %v352 = vrot.slane %v344, %v351
  %v354 = vunpack.c.l.s4 1934713408
  %v355 = vunpack.c.0.s8 %v354
  %v356 = vlaneseq
  %v357 = vshrl.u32 %v356, 7
  %v358 = vsub.s32 %v355, %v357
  %v359 = vrot.slane %v345, %v358
  %v360 = vcombine.low %v304, %v336
  %v361 = vcombine.high %v304, %v336
  %v362 = vcombine.low %v311, %v343
  %v363 = vcombine.high %v311, %v343
  %v364 = vcombine.low %v320, %v352
  %v365 = vcombine.high %v320, %v352
  %v366 = vcombine.low %v327, %v359
  %v367 = vcombine.high %v327, %v359
  %v368 = vcombine.low %v49, %v91
  %v369 = vcombine.high %v49, %v91
  %v371 = vunpack.c.l.s4 1983009808
  %v372 = vunpack.c.0.s8 %v371
  %v373 = vlaneseq
  %v374 = vshrl.u32 %v373, 7
  %v375 = vsub.s32 %v372, %v374
  %v376 = vrot.slane %v368, %v375
  %v378 = vunpack.c.l.s4 1983009808
  %v379 = vunpack.c.0.s8 %v378
  %v380 = vlaneseq
  %v381 = vshrl.u32 %v380, 7
  %v382 = vsub.s32 %v379, %v381
  %v383 = vrot.slane %v369, %v382
  %v384 = vcombine.low %v67, %v115
  %v385 = vcombine.high %v67, %v115
  %v387 = vunpack.c.l.s4 1983009808
  %v388 = vunpack.c.0.s8 %v387
  %v389 = vlaneseq
  %v390 = vshrl.u32 %v389, 7
  %v391 = vsub.s32 %v388, %v390
  %v392 = vrot.slane %v384, %v391
  %v394 = vunpack.c.l.s4 1983009808
  %v395 = vunpack.c.0.s8 %v394
  %v396 = vlaneseq
  %v397 = vshrl.u32 %v396, 7
  %v398 = vsub.s32 %v395, %v397
  %v399 = vrot.slane %v385, %v398
  %v400 = vcombine.low %v139, %v187
  %v401 = vcombine.high %v139, %v187
  %v403 = vunpack.c.l.s4 1983009808
  %v404 = vunpack.c.0.s8 %v403
  %v405 = vlaneseq
  %v406 = vshrl.u32 %v405, 7
  %v407 = vsub.s32 %v404, %v406
  %v408 = vrot.slane %v400, %v407
  %v410 = vunpack.c.l.s4 1983009808
  %v411 = vunpack.c.0.s8 %v410
  %v412 = vlaneseq
  %v413 = vshrl.u32 %v412, 7
  %v414 = vsub.s32 %v411, %v413
  %v415 = vrot.slane %v401, %v414
  %v416 = vcombine.low %v163, %v211
  %v417 = vcombine.high %v163, %v211
  %v419 = vunpack.c.l.s4 1983009808
  %v420 = vunpack.c.0.s8 %v419
  %v421 = vlaneseq
  %v422 = vshrl.u32 %v421, 7
  %v423 = vsub.s32 %v420, %v422
  %v424 = vrot.slane %v416, %v423
  %v426 = vunpack.c.l.s4 1983009808
  %v427 = vunpack.c.0.s8 %v426
  %v428 = vlaneseq
  %v429 = vshrl.u32 %v428, 7
  %v430 = vsub.s32 %v427, %v429
  %v431 = vrot.slane %v417, %v430
  %v432 = vcombine.low %v376, %v392
  %v433 = vcombine.high %v376, %v392
  %v435 = vunpack.c.l.s4 1934713408
  %v436 = vunpack.c.0.s8 %v435
  %v437 = vlaneseq
  %v438 = vshrl.u32 %v437, 7
  %v439 = vsub.s32 %v436, %v438
  %v440 = vrot.slane %v432, %v439
  %v442 = vunpack.c.l.s4 1934713408
  %v443 = vunpack.c.0.s8 %v442
  %v444 = vlaneseq
  %v445 = vshrl.u32 %v444, 7
  %v446 = vsub.s32 %v443, %v445
  %v447 = vrot.slane %v433, %v446
  %v448 = vcombine.low %v383, %v399
  %v449 = vcombine.high %v383, %v399
  %v451 = vunpack.c.l.s4 1934713408
  %v452 = vunpack.c.0.s8 %v451
  %v453 = vlaneseq
  %v454 = vshrl.u32 %v453, 7
  %v455 = vsub.s32 %v452, %v454
  %v456 = vrot.slane %v448, %v455
  %v458 = vunpack.c.l.s4 1934713408
  %v459 = vunpack.c.0.s8 %v458
  %v460 = vlaneseq
  %v461 = vshrl.u32 %v460, 7
  %v462 = vsub.s32 %v459, %v461
  %v463 = vrot.slane %v449, %v462
  %v464 = vcombine.low %v408, %v424
  %v465 = vcombine.high %v408, %v424
  %v467 = vunpack.c.l.s4 1934713408
  %v468 = vunpack.c.0.s8 %v467
  %v469 = vlaneseq
  %v470 = vshrl.u32 %v469, 7
  %v471 = vsub.s32 %v468, %v470
  %v472 = vrot.slane %v464, %v471
  %v474 = vunpack.c.l.s4 1934713408
  %v475 = vunpack.c.0.s8 %v474
  %v476 = vlaneseq
  %v477 = vshrl.u32 %v476, 7
  %v478 = vsub.s32 %v475, %v477
  %v479 = vrot.slane %v465, %v478
  %v480 = vcombine.low %v415, %v431
  %v481 = vcombine.high %v415, %v431
  %v483 = vunpack.c.l.s4 1934713408
  %v484 = vunpack.c.0.s8 %v483
  %v485 = vlaneseq
  %v486 = vshrl.u32 %v485, 7
  %v487 = vsub.s32 %v484, %v486
  %v488 = vrot.slane %v480, %v487
  %v490 = vunpack.c.l.s4 1934713408
  %v491 = vunpack.c.0.s8 %v490
  %v492 = vlaneseq
  %v493 = vshrl.u32 %v492, 7
  %v494 = vsub.s32 %v491, %v493
  %v495 = vrot.slane %v481, %v494
  %v496 = vcombine.low %v440, %v472
  %v497 = vcombine.high %v440, %v472
  %v498 = vcombine.low %v447, %v479
  %v499 = vcombine.high %v447, %v479
  %v500 = vcombine.low %v456, %v488
  %v501 = vcombine.high %v456, %v488
  %v502 = vcombine.low %v463, %v495
  %v503 = vcombine.high %v463, %v495
  %v504 = vcombine.low %v50, %v93
  %v505 = vcombine.high %v50, %v93
  %v507 = vunpack.c.l.s4 1983009808
  %v508 = vunpack.c.0.s8 %v507
  %v509 = vlaneseq
  %v510 = vshrl.u32 %v509, 7
  %v511 = vsub.s32 %v508, %v510
  %v512 = vrot.slane %v504, %v511
  %v514 = vunpack.c.l.s4 1983009808
  %v515 = vunpack.c.0.s8 %v514
  %v516 = vlaneseq
  %v517 = vshrl.u32 %v516, 7
  %v518 = vsub.s32 %v515, %v517
  %v519 = vrot.slane %v505, %v518
  %v520 = vcombine.low %v69, %v117
  %v521 = vcombine.high %v69, %v117
  %v523 = vunpack.c.l.s4 1983009808
  %v524 = vunpack.c.0.s8 %v523
  %v525 = vlaneseq
  %v526 = vshrl.u32 %v525, 7
  %v527 = vsub.s32 %v524, %v526
  %v528 = vrot.slane %v520, %v527
  %v530 = vunpack.c.l.s4 1983009808
  %v531 = vunpack.c.0.s8 %v530
  %v532 = vlaneseq
  %v533 = vshrl.u32 %v532, 7
  %v534 = vsub.s32 %v531, %v533
  %v535 = vrot.slane %v521, %v534
  %v536 = vcombine.low %v141, %v189
  %v537 = vcombine.high %v141, %v189
  %v539 = vunpack.c.l.s4 1983009808
  %v540 = vunpack.c.0.s8 %v539
  %v541 = vlaneseq
  %v542 = vshrl.u32 %v541, 7
  %v543 = vsub.s32 %v540, %v542
  %v544 = vrot.slane %v536, %v543
  %v546 = vunpack.c.l.s4 1983009808
  %v547 = vunpack.c.0.s8 %v546
  %v548 = vlaneseq
  %v549 = vshrl.u32 %v548, 7
  %v550 = vsub.s32 %v547, %v549
  %v551 = vrot.slane %v537, %v550
  %v552 = vcombine.low %v165, %v213
  %v553 = vcombine.high %v165, %v213
  %v555 = vunpack.c.l.s4 1983009808
  %v556 = vunpack.c.0.s8 %v555
  %v557 = vlaneseq
  %v558 = vshrl.u32 %v557, 7
  %v559 = vsub.s32 %v556, %v558
  %v560 = vrot.slane %v552, %v559
  %v562 = vunpack.c.l.s4 1983009808
  %v563 = vunpack.c.0.s8 %v562
  %v564 = vlaneseq
  %v565 = vshrl.u32 %v564, 7
  %v566 = vsub.s32 %v563, %v565
  %v567 = vrot.slane %v553, %v566
  %v568 = vcombine.low %v512, %v528
  %v569 = vcombine.high %v512, %v528
  %v571 = vunpack.c.l.s4 1934713408
  %v572 = vunpack.c.0.s8 %v571
  %v573 = vlaneseq
  %v574 = vshrl.u32 %v573, 7
  %v575 = vsub.s32 %v572, %v574
  %v576 = vrot.slane %v568, %v575
  %v578 = vunpack.c.l.s4 1934713408
  %v579 = vunpack.c.0.s8 %v578
  %v580 = vlaneseq
  %v581 = vshrl.u32 %v580, 7
  %v582 = vsub.s32 %v579, %v581
  %v583 = vrot.slane %v569, %v582
  %v584 = vcombine.low %v519, %v535
  %v585 = vcombine.high %v519, %v535
  %v587 = vunpack.c.l.s4 1934713408
  %v588 = vunpack.c.0.s8 %v587
  %v589 = vlaneseq
  %v590 = vshrl.u32 %v589, 7
  %v591 = vsub.s32 %v588, %v590
  %v592 = vrot.slane %v584, %v591
  %v594 = vunpack.c.l.s4 1934713408
  %v595 = vunpack.c.0.s8 %v594
  %v596 = vlaneseq
  %v597 = vshrl.u32 %v596, 7
  %v598 = vsub.s32 %v595, %v597
  %v599 = vrot.slane %v585, %v598
  %v600 = vcombine.low %v544, %v560
  %v601 = vcombine.high %v544, %v560
  %v603 = vunpack.c.l.s4 1934713408
  %v604 = vunpack.c.0.s8 %v603
  %v605 = vlaneseq
  %v606 = vshrl.u32 %v605, 7
  %v607 = vsub.s32 %v604, %v606
  %v608 = vrot.slane %v600, %v607
  %v610 = vunpack.c.l.s4 1934713408
  %v611 = vunpack.c.0.s8 %v610
  %v612 = vlaneseq
  %v613 = vshrl.u32 %v612, 7
  %v614 = vsub.s32 %v611, %v613
  %v615 = vrot.slane %v601, %v614
  %v616 = vcombine.low %v551, %v567
  %v617 = vcombine.high %v551, %v567
  %v619 = vunpack.c.l.s4 1934713408
  %v620 = vunpack.c.0.s8 %v619
  %v621 = vlaneseq
  %v622 = vshrl.u32 %v621, 7
  %v623 = vsub.s32 %v620, %v622
  %v624 = vrot.slane %v616, %v623
  %v626 = vunpack.c.l.s4 1934713408
  %v627 = vunpack.c.0.s8 %v626
  %v628 = vlaneseq
  %v629 = vshrl.u32 %v628, 7
  %v630 = vsub.s32 %v627, %v629
  %v631 = vrot.slane %v617, %v630
  %v632 = vcombine.low %v576, %v608
  %v633 = vcombine.high %v576, %v608
  %v634 = vcombine.low %v583, %v615
  %v635 = vcombine.high %v583, %v615
  %v636 = vcombine.low %v592, %v624
  %v637 = vcombine.high %v592, %v624
  %v638 = vcombine.low %v599, %v631
  %v639 = vcombine.high %v599, %v631
  %v640 = vcombine.low %v51, %v95
  %v641 = vcombine.high %v51, %v95
  %v643 = vunpack.c.l.s4 1983009808
  %v644 = vunpack.c.0.s8 %v643
  %v645 = vlaneseq
  %v646 = vshrl.u32 %v645, 7
  %v647 = vsub.s32 %v644, %v646
  %v648 = vrot.slane %v640, %v647
  %v650 = vunpack.c.l.s4 1983009808
  %v651 = vunpack.c.0.s8 %v650
  %v652 = vlaneseq
  %v653 = vshrl.u32 %v652, 7
  %v654 = vsub.s32 %v651, %v653
  %v655 = vrot.slane %v641, %v654
  %v656 = vcombine.low %v71, %v119
  %v657 = vcombine.high %v71, %v119
  %v659 = vunpack.c.l.s4 1983009808
  %v660 = vunpack.c.0.s8 %v659
  %v661 = vlaneseq
  %v662 = vshrl.u32 %v661, 7
  %v663 = vsub.s32 %v660, %v662
  %v664 = vrot.slane %v656, %v663
  %v666 = vunpack.c.l.s4 1983009808
  %v667 = vunpack.c.0.s8 %v666
  %v668 = vlaneseq
  %v669 = vshrl.u32 %v668, 7
  %v670 = vsub.s32 %v667, %v669
  %v671 = vrot.slane %v657, %v670
  %v672 = vcombine.low %v143, %v191
  %v673 = vcombine.high %v143, %v191
  %v675 = vunpack.c.l.s4 1983009808
  %v676 = vunpack.c.0.s8 %v675
  %v677 = vlaneseq
  %v678 = vshrl.u32 %v677, 7
  %v679 = vsub.s32 %v676, %v678
  %v680 = vrot.slane %v672, %v679
  %v682 = vunpack.c.l.s4 1983009808
  %v683 = vunpack.c.0.s8 %v682
  %v684 = vlaneseq
  %v685 = vshrl.u32 %v684, 7
  %v686 = vsub.s32 %v683, %v685
  %v687 = vrot.slane %v673, %v686
  %v688 = vcombine.low %v167, %v215
  %v689 = vcombine.high %v167, %v215
  %v691 = vunpack.c.l.s4 1983009808
  %v692 = vunpack.c.0.s8 %v691
  %v693 = vlaneseq
  %v694 = vshrl.u32 %v693, 7
  %v695 = vsub.s32 %v692, %v694
  %v696 = vrot.slane %v688, %v695
  %v698 = vunpack.c.l.s4 1983009808
  %v699 = vunpack.c.0.s8 %v698
  %v700 = vlaneseq
  %v701 = vshrl.u32 %v700, 7
  %v702 = vsub.s32 %v699, %v701
  %v703 = vrot.slane %v689, %v702
  %v704 = vcombine.low %v648, %v664
  %v705 = vcombine.high %v648, %v664
  %v707 = vunpack.c.l.s4 1934713408
  %v708 = vunpack.c.0.s8 %v707
  %v709 = vlaneseq
  %v710 = vshrl.u32 %v709, 7
  %v711 = vsub.s32 %v708, %v710
  %v712 = vrot.slane %v704, %v711
  %v714 = vunpack.c.l.s4 1934713408
  %v715 = vunpack.c.0.s8 %v714
  %v716 = vlaneseq
  %v717 = vshrl.u32 %v716, 7
  %v718 = vsub.s32 %v715, %v717
  %v719 = vrot.slane %v705, %v718
  %v720 = vcombine.low %v655, %v671
  %v721 = vcombine.high %v655, %v671
  %v723 = vunpack.c.l.s4 1934713408
  %v724 = vunpack.c.0.s8 %v723
  %v725 = vlaneseq
  %v726 = vshrl.u32 %v725, 7
  %v727 = vsub.s32 %v724, %v726
  %v728 = vrot.slane %v720, %v727
  %v730 = vunpack.c.l.s4 1934713408
  %v731 = vunpack.c.0.s8 %v730
  %v732 = vlaneseq
  %v733 = vshrl.u32 %v732, 7
  %v734 = vsub.s32 %v731, %v733
  %v735 = vrot.slane %v721, %v734
  %v736 = vcombine.low %v680, %v696
  %v737 = vcombine.high %v680, %v696
  %v739 = vunpack.c.l.s4 1934713408
  %v740 = vunpack.c.0.s8 %v739
  %v741 = vlaneseq
  %v742 = vshrl.u32 %v741, 7
  %v743 = vsub.s32 %v740, %v742
  %v744 = vrot.slane %v736, %v743
  %v746 = vunpack.c.l.s4 1934713408
  %v747 = vunpack.c.0.s8 %v746
  %v748 = vlaneseq
  %v749 = vshrl.u32 %v748, 7
  %v750 = vsub.s32 %v747, %v749
  %v751 = vrot.slane %v737, %v750
  %v752 = vcombine.low %v687, %v703
  %v753 = vcombine.high %v687, %v703
  %v755 = vunpack.c.l.s4 1934713408
  %v756 = vunpack.c.0.s8 %v755
  %v757 = vlaneseq
  %v758 = vshrl.u32 %v757, 7
  %v759 = vsub.s32 %v756, %v758
  %v760 = vrot.slane %v752, %v759
  %v762 = vunpack.c.l.s4 1934713408
  %v763 = vunpack.c.0.s8 %v762
  %v764 = vlaneseq
  %v765 = vshrl.u32 %v764, 7
  %v766 = vsub.s32 %v763, %v765
  %v767 = vrot.slane %v753, %v766
  %v768 = vcombine.low %v712, %v744
  %v769 = vcombine.high %v712, %v744
  %v770 = vcombine.low %v719, %v751
  %v771 = vcombine.high %v719, %v751
  %v772 = vcombine.low %v728, %v760
  %v773 = vcombine.high %v728, %v760
  %v774 = vcombine.low %v735, %v767
  %v775 = vcombine.high %v735, %v767
  %v776 = vcombine.low %v52, %v97
  %v777 = vcombine.high %v52, %v97
  %v779 = vunpack.c.l.s4 1983009808
  %v780 = vunpack.c.0.s8 %v779
  %v781 = vlaneseq
  %v782 = vshrl.u32 %v781, 7
  %v783 = vsub.s32 %v780, %v782
  %v784 = vrot.slane %v776, %v783
  %v786 = vunpack.c.l.s4 1983009808
  %v787 = vunpack.c.0.s8 %v786
  %v788 = vlaneseq
  %v789 = vshrl.u32 %v788, 7
  %v790 = vsub.s32 %v787, %v789
  %v791 = vrot.slane %v777, %v790
  %v792 = vcombine.low %v73, %v121
  %v793 = vcombine.high %v73, %v121
  %v795 = vunpack.c.l.s4 1983009808
  %v796 = vunpack.c.0.s8 %v795
  %v797 = vlaneseq
  %v798 = vshrl.u32 %v797, 7
  %v799 = vsub.s32 %v796, %v798
  %v800 = vrot.slane %v792, %v799
  %v802 = vunpack.c.l.s4 1983009808
  %v803 = vunpack.c.0.s8 %v802
  %v804 = vlaneseq
  %v805 = vshrl.u32 %v804, 7
  %v806 = vsub.s32 %v803, %v805
  %v807 = vrot.slane %v793, %v806
  %v808 = vcombine.low %v145, %v193
  %v809 = vcombine.high %v145, %v193
  %v811 = vunpack.c.l.s4 1983009808
  %v812 = vunpack.c.0.s8 %v811
  %v813 = vlaneseq
  %v814 = vshrl.u32 %v813, 7
  %v815 = vsub.s32 %v812, %v814
  %v816 = vrot.slane %v808, %v815
  %v818 = vunpack.c.l.s4 1983009808
  %v819 = vunpack.c.0.s8 %v818
  %v820 = vlaneseq
  %v821 = vshrl.u32 %v820, 7
  %v822 = vsub.s32 %v819, %v821
  %v823 = vrot.slane %v809, %v822
  %v824 = vcombine.low %v169, %v217
  %v825 = vcombine.high %v169, %v217
  %v827 = vunpack.c.l.s4 1983009808
  %v828 = vunpack.c.0.s8 %v827
  %v829 = vlaneseq
  %v830 = vshrl.u32 %v829, 7
  %v831 = vsub.s32 %v828, %v830
  %v832 = vrot.slane %v824, %v831
  %v834 = vunpack.c.l.s4 1983009808
  %v835 = vunpack.c.0.s8 %v834
  %v836 = vlaneseq
  %v837 = vshrl.u32 %v836, 7
  %v838 = vsub.s32 %v835, %v837
  %v839 = vrot.slane %v825, %v838
  %v840 = vcombine.low %v784, %v800
  %v841 = vcombine.high %v784, %v800
  %v843 = vunpack.c.l.s4 1934713408
  %v844 = vunpack.c.0.s8 %v843
  %v845 = vlaneseq
  %v846 = vshrl.u32 %v845, 7
  %v847 = vsub.s32 %v844, %v846
  %v848 = vrot.slane %v840, %v847
  %v850 = vunpack.c.l.s4 1934713408
  %v851 = vunpack.c.0.s8 %v850
  %v852 = vlaneseq
  %v853 = vshrl.u32 %v852, 7
  %v854 = vsub.s32 %v851, %v853
  %v855 = vrot.slane %v841, %v854
  %v856 = vcombine.low %v791, %v807
  %v857 = vcombine.high %v791, %v807
  %v859 = vunpack.c.l.s4 1934713408
  %v860 = vunpack.c.0.s8 %v859
  %v861 = vlaneseq
  %v862 = vshrl.u32 %v861, 7
  %v863 = vsub.s32 %v860, %v862
  %v864 = vrot.slane %v856, %v863
  %v866 = vunpack.c.l.s4 1934713408
  %v867 = vunpack.c.0.s8 %v866
  %v868 = vlaneseq
  %v869 = vshrl.u32 %v868, 7
  %v870 = vsub.s32 %v867, %v869
  %v871 = vrot.slane %v857, %v870
  %v872 = vcombine.low %v816, %v832
  %v873 = vcombine.high %v816, %v832
  %v875 = vunpack.c.l.s4 1934713408
  %v876 = vunpack.c.0.s8 %v875
  %v877 = vlaneseq
  %v878 = vshrl.u32 %v877, 7
  %v879 = vsub.s32 %v876, %v878
  %v880 = vrot.slane %v872, %v879
  %v882 = vunpack.c.l.s4 1934713408
  %v883 = vunpack.c.0.s8 %v882
  %v884 = vlaneseq
  %v885 = vshrl.u32 %v884, 7
  %v886 = vsub.s32 %v883, %v885
  %v887 = vrot.slane %v873, %v886
  %v888 = vcombine.low %v823, %v839
  %v889 = vcombine.high %v823, %v839
  %v891 = vunpack.c.l.s4 1934713408
  %v892 = vunpack.c.0.s8 %v891
  %v893 = vlaneseq
  %v894 = vshrl.u32 %v893, 7
  %v895 = vsub.s32 %v892, %v894
  %v896 = vrot.slane %v888, %v895
  %v898 = vunpack.c.l.s4 1934713408
  %v899 = vunpack.c.0.s8 %v898
  %v900 = vlaneseq
  %v901 = vshrl.u32 %v900, 7
  %v902 = vsub.s32 %v899, %v901
  %v903 = vrot.slane %v889, %v902
  %v904 = vcombine.low %v848, %v880
  %v905 = vcombine.high %v848, %v880
  %v906 = vcombine.low %v855, %v887
  %v907 = vcombine.high %v855, %v887
  %v908 = vcombine.low %v864, %v896
  %v909 = vcombine.high %v864, %v896
  %v910 = vcombine.low %v871, %v903
  %v911 = vcombine.high %v871, %v903
  %v912 = vcombine.low %v53, %v99
  %v913 = vcombine.high %v53, %v99
  %v915 = vunpack.c.l.s4 1983009808
  %v916 = vunpack.c.0.s8 %v915
  %v917 = vlaneseq
  %v918 = vshrl.u32 %v917, 7
  %v919 = vsub.s32 %v916, %v918
  %v920 = vrot.slane %v912, %v919
  %v922 = vunpack.c.l.s4 1983009808
  %v923 = vunpack.c.0.s8 %v922
  %v924 = vlaneseq
  %v925 = vshrl.u32 %v924, 7
  %v926 = vsub.s32 %v923, %v925
  %v927 = vrot.slane %v913, %v926
  %v928 = vcombine.low %v75, %v123
  %v929 = vcombine.high %v75, %v123
  %v931 = vunpack.c.l.s4 1983009808
  %v932 = vunpack.c.0.s8 %v931
  %v933 = vlaneseq
  %v934 = vshrl.u32 %v933, 7
  %v935 = vsub.s32 %v932, %v934
  %v936 = vrot.slane %v928, %v935
  %v938 = vunpack.c.l.s4 1983009808
  %v939 = vunpack.c.0.s8 %v938
  %v940 = vlaneseq
  %v941 = vshrl.u32 %v940, 7
  %v942 = vsub.s32 %v939, %v941
  %v943 = vrot.slane %v929, %v942
  %v944 = vcombine.low %v147, %v195
  %v945 = vcombine.high %v147, %v195
  %v947 = vunpack.c.l.s4 1983009808
  %v948 = vunpack.c.0.s8 %v947
  %v949 = vlaneseq
  %v950 = vshrl.u32 %v949, 7
  %v951 = vsub.s32 %v948, %v950
  %v952 = vrot.slane %v944, %v951
  %v954 = vunpack.c.l.s4 1983009808
  %v955 = vunpack.c.0.s8 %v954
  %v956 = vlaneseq
  %v957 = vshrl.u32 %v956, 7
  %v958 = vsub.s32 %v955, %v957
  %v959 = vrot.slane %v945, %v958
  %v960 = vcombine.low %v171, %v219
  %v961 = vcombine.high %v171, %v219
  %v963 = vunpack.c.l.s4 1983009808
  %v964 = vunpack.c.0.s8 %v963
  %v965 = vlaneseq
  %v966 = vshrl.u32 %v965, 7
  %v967 = vsub.s32 %v964, %v966
  %v968 = vrot.slane %v960, %v967
  %v970 = vunpack.c.l.s4 1983009808
  %v971 = vunpack.c.0.s8 %v970
  %v972 = vlaneseq
  %v973 = vshrl.u32 %v972, 7
  %v974 = vsub.s32 %v971, %v973
  %v975 = vrot.slane %v961, %v974
  %v976 = vcombine.low %v920, %v936
  %v977 = vcombine.high %v920, %v936
  %v979 = vunpack.c.l.s4 1934713408
  %v980 = vunpack.c.0.s8 %v979
  %v981 = vlaneseq
  %v982 = vshrl.u32 %v981, 7
  %v983 = vsub.s32 %v980, %v982
  %v984 = vrot.slane %v976, %v983
  %v986 = vunpack.c.l.s4 1934713408
  %v987 = vunpack.c.0.s8 %v986
  %v988 = vlaneseq
  %v989 = vshrl.u32 %v988, 7
  %v990 = vsub.s32 %v987, %v989
  %v991 = vrot.slane %v977, %v990
  %v992 = vcombine.low %v927, %v943
  %v993 = vcombine.high %v927, %v943
  %v995 = vunpack.c.l.s4 1934713408
  %v996 = vunpack.c.0.s8 %v995
  %v997 = vlaneseq
  %v998 = vshrl.u32 %v997, 7
  %v999 = vsub.s32 %v996, %v998
  %v1000 = vrot.slane %v992, %v999
  %v1002 = vunpack.c.l.s4 1934713408
  %v1003 = vunpack.c.0.s8 %v1002
  %v1004 = vlaneseq
  %v1005 = vshrl.u32 %v1004, 7
  %v1006 = vsub.s32 %v1003, %v1005
  %v1007 = vrot.slane %v993, %v1006
  %v1008 = vcombine.low %v952, %v968
  %v1009 = vcombine.high %v952, %v968
  %v1011 = vunpack.c.l.s4 1934713408
  %v1012 = vunpack.c.0.s8 %v1011
  %v1013 = vlaneseq
  %v1014 = vshrl.u32 %v1013, 7
  %v1015 = vsub.s32 %v1012, %v1014
  %v1016 = vrot.slane %v1008, %v1015
  %v1018 = vunpack.c.l.s4 1934713408
  %v1019 = vunpack.c.0.s8 %v1018
  %v1020 = vlaneseq
  %v1021 = vshrl.u32 %v1020, 7
  %v1022 = vsub.s32 %v1019, %v1021
  %v1023 = vrot.slane %v1009, %v1022
  %v1024 = vcombine.low %v959, %v975
  %v1025 = vcombine.high %v959, %v975
  %v1027 = vunpack.c.l.s4 1934713408
  %v1028 = vunpack.c.0.s8 %v1027
  %v1029 = vlaneseq
  %v1030 = vshrl.u32 %v1029, 7
  %v1031 = vsub.s32 %v1028, %v1030
  %v1032 = vrot.slane %v1024, %v1031
  %v1034 = vunpack.c.l.s4 1934713408
  %v1035 = vunpack.c.0.s8 %v1034
  %v1036 = vlaneseq
  %v1037 = vshrl.u32 %v1036, 7
  %v1038 = vsub.s32 %v1035, %v1037
  %v1039 = vrot.slane %v1025, %v1038
  %v1040 = vcombine.low %v984, %v1016
  %v1041 = vcombine.high %v984, %v1016
  %v1042 = vcombine.low %v991, %v1023
  %v1043 = vcombine.high %v991, %v1023
  %v1044 = vcombine.low %v1000, %v1032
  %v1045 = vcombine.high %v1000, %v1032
  %v1046 = vcombine.low %v1007, %v1039
  %v1047 = vcombine.high %v1007, %v1039
  %v1048 = vcombine.low %v54, %v101
  %v1049 = vcombine.high %v54, %v101
  %v1051 = vunpack.c.l.s4 1983009808
  %v1052 = vunpack.c.0.s8 %v1051
  %v1053 = vlaneseq
  %v1054 = vshrl.u32 %v1053, 7
  %v1055 = vsub.s32 %v1052, %v1054
  %v1056 = vrot.slane %v1048, %v1055
  %v1058 = vunpack.c.l.s4 1983009808
  %v1059 = vunpack.c.0.s8 %v1058
  %v1060 = vlaneseq
  %v1061 = vshrl.u32 %v1060, 7
  %v1062 = vsub.s32 %v1059, %v1061
  %v1063 = vrot.slane %v1049, %v1062
  %v1064 = vcombine.low %v77, %v125
  %v1065 = vcombine.high %v77, %v125
  %v1067 = vunpack.c.l.s4 1983009808
  %v1068 = vunpack.c.0.s8 %v1067
  %v1069 = vlaneseq
  %v1070 = vshrl.u32 %v1069, 7
  %v1071 = vsub.s32 %v1068, %v1070
  %v1072 = vrot.slane %v1064, %v1071
  %v1074 = vunpack.c.l.s4 1983009808
  %v1075 = vunpack.c.0.s8 %v1074
  %v1076 = vlaneseq
  %v1077 = vshrl.u32 %v1076, 7
  %v1078 = vsub.s32 %v1075, %v1077
  %v1079 = vrot.slane %v1065, %v1078
  %v1080 = vcombine.low %v149, %v197
  %v1081 = vcombine.high %v149, %v197
  %v1083 = vunpack.c.l.s4 1983009808
  %v1084 = vunpack.c.0.s8 %v1083
  %v1085 = vlaneseq
  %v1086 = vshrl.u32 %v1085, 7
  %v1087 = vsub.s32 %v1084, %v1086
  %v1088 = vrot.slane %v1080, %v1087
  %v1090 = vunpack.c.l.s4 1983009808
  %v1091 = vunpack.c.0.s8 %v1090
  %v1092 = vlaneseq
  %v1093 = vshrl.u32 %v1092, 7
  %v1094 = vsub.s32 %v1091, %v1093
  %v1095 = vrot.slane %v1081, %v1094
  %v1096 = vcombine.low %v173, %v221
  %v1097 = vcombine.high %v173, %v221
  %v1099 = vunpack.c.l.s4 1983009808
  %v1100 = vunpack.c.0.s8 %v1099
  %v1101 = vlaneseq
  %v1102 = vshrl.u32 %v1101, 7
  %v1103 = vsub.s32 %v1100, %v1102
  %v1104 = vrot.slane %v1096, %v1103
  %v1106 = vunpack.c.l.s4 1983009808
  %v1107 = vunpack.c.0.s8 %v1106
  %v1108 = vlaneseq
  %v1109 = vshrl.u32 %v1108, 7
  %v1110 = vsub.s32 %v1107, %v1109
  %v1111 = vrot.slane %v1097, %v1110
  %v1112 = vcombine.low %v1056, %v1072
  %v1113 = vcombine.high %v1056, %v1072
  %v1115 = vunpack.c.l.s4 1934713408
  %v1116 = vunpack.c.0.s8 %v1115
  %v1117 = vlaneseq
  %v1118 = vshrl.u32 %v1117, 7
  %v1119 = vsub.s32 %v1116, %v1118
  %v1120 = vrot.slane %v1112, %v1119
  %v1122 = vunpack.c.l.s4 1934713408
  %v1123 = vunpack.c.0.s8 %v1122
  %v1124 = vlaneseq
  %v1125 = vshrl.u32 %v1124, 7
  %v1126 = vsub.s32 %v1123, %v1125
  %v1127 = vrot.slane %v1113, %v1126
  %v1128 = vcombine.low %v1063, %v1079
  %v1129 = vcombine.high %v1063, %v1079
  %v1131 = vunpack.c.l.s4 1934713408
  %v1132 = vunpack.c.0.s8 %v1131
  %v1133 = vlaneseq
  %v1134 = vshrl.u32 %v1133, 7
  %v1135 = vsub.s32 %v1132, %v1134
  %v1136 = vrot.slane %v1128, %v1135
  %v1138 = vunpack.c.l.s4 1934713408
  %v1139 = vunpack.c.0.s8 %v1138
  %v1140 = vlaneseq
  %v1141 = vshrl.u32 %v1140, 7
  %v1142 = vsub.s32 %v1139, %v1141
  %v1143 = vrot.slane %v1129, %v1142
  %v1144 = vcombine.low %v1088, %v1104
  %v1145 = vcombine.high %v1088, %v1104
  %v1147 = vunpack.c.l.s4 1934713408
  %v1148 = vunpack.c.0.s8 %v1147
  %v1149 = vlaneseq
  %v1150 = vshrl.u32 %v1149, 7
  %v1151 = vsub.s32 %v1148, %v1150
  %v1152 = vrot.slane %v1144, %v1151
  %v1154 = vunpack.c.l.s4 1934713408
  %v1155 = vunpack.c.0.s8 %v1154
  %v1156 = vlaneseq
  %v1157 = vshrl.u32 %v1156, 7
  %v1158 = vsub.s32 %v1155, %v1157
  %v1159 = vrot.slane %v1145, %v1158
  %v1160 = vcombine.low %v1095, %v1111
  %v1161 = vcombine.high %v1095, %v1111
  %v1163 = vunpack.c.l.s4 1934713408
  %v1164 = vunpack.c.0.s8 %v1163
  %v1165 = vlaneseq
  %v1166 = vshrl.u32 %v1165, 7
  %v1167 = vsub.s32 %v1164, %v1166
  %v1168 = vrot.slane %v1160, %v1167
  %v1170 = vunpack.c.l.s4 1934713408
  %v1171 = vunpack.c.0.s8 %v1170
  %v1172 = vlaneseq
  %v1173 = vshrl.u32 %v1172, 7
  %v1174 = vsub.s32 %v1171, %v1173
  %v1175 = vrot.slane %v1161, %v1174
  %v1176 = vcombine.low %v1120, %v1152
  %v1177 = vcombine.high %v1120, %v1152
  %v1178 = vcombine.low %v1127, %v1159
  %v1179 = vcombine.high %v1127, %v1159
  %v1180 = vcombine.low %v1136, %v1168
  %v1181 = vcombine.high %v1136, %v1168
  %v1182 = vcombine.low %v1143, %v1175
  %v1183 = vcombine.high %v1143, %v1175
  %v1184 = vcombine.low %v55, %v103
  %v1185 = vcombine.high %v55, %v103
  %v1187 = vunpack.c.l.s4 1983009808
  %v1188 = vunpack.c.0.s8 %v1187
  %v1189 = vlaneseq
  %v1190 = vshrl.u32 %v1189, 7
  %v1191 = vsub.s32 %v1188, %v1190
  %v1192 = vrot.slane %v1184, %v1191
  %v1194 = vunpack.c.l.s4 1983009808
  %v1195 = vunpack.c.0.s8 %v1194
  %v1196 = vlaneseq
  %v1197 = vshrl.u32 %v1196, 7
  %v1198 = vsub.s32 %v1195, %v1197
  %v1199 = vrot.slane %v1185, %v1198
  %v1200 = vcombine.low %v79, %v127
  %v1201 = vcombine.high %v79, %v127
  %v1203 = vunpack.c.l.s4 1983009808
  %v1204 = vunpack.c.0.s8 %v1203
  %v1205 = vlaneseq
  %v1206 = vshrl.u32 %v1205, 7
  %v1207 = vsub.s32 %v1204, %v1206
  %v1208 = vrot.slane %v1200, %v1207
  %v1210 = vunpack.c.l.s4 1983009808
  %v1211 = vunpack.c.0.s8 %v1210
  %v1212 = vlaneseq
  %v1213 = vshrl.u32 %v1212, 7
  %v1214 = vsub.s32 %v1211, %v1213
  %v1215 = vrot.slane %v1201, %v1214
  %v1216 = vcombine.low %v151, %v199
  %v1217 = vcombine.high %v151, %v199
  %v1219 = vunpack.c.l.s4 1983009808
  %v1220 = vunpack.c.0.s8 %v1219
  %v1221 = vlaneseq
  %v1222 = vshrl.u32 %v1221, 7
  %v1223 = vsub.s32 %v1220, %v1222
  %v1224 = vrot.slane %v1216, %v1223
  %v1226 = vunpack.c.l.s4 1983009808
  %v1227 = vunpack.c.0.s8 %v1226
  %v1228 = vlaneseq
  %v1229 = vshrl.u32 %v1228, 7
  %v1230 = vsub.s32 %v1227, %v1229
  %v1231 = vrot.slane %v1217, %v1230
  %v1232 = vcombine.low %v175, %v223
  %v1233 = vcombine.high %v175, %v223
  %v1235 = vunpack.c.l.s4 1983009808
  %v1236 = vunpack.c.0.s8 %v1235
  %v1237 = vlaneseq
  %v1238 = vshrl.u32 %v1237, 7
  %v1239 = vsub.s32 %v1236, %v1238
  %v1240 = vrot.slane %v1232, %v1239
  %v1242 = vunpack.c.l.s4 1983009808
  %v1243 = vunpack.c.0.s8 %v1242
  %v1244 = vlaneseq
  %v1245 = vshrl.u32 %v1244, 7
  %v1246 = vsub.s32 %v1243, %v1245
  %v1247 = vrot.slane %v1233, %v1246
  %v1248 = vcombine.low %v1192, %v1208
  %v1249 = vcombine.high %v1192, %v1208
  %v1251 = vunpack.c.l.s4 1934713408
  %v1252 = vunpack.c.0.s8 %v1251
  %v1253 = vlaneseq
  %v1254 = vshrl.u32 %v1253, 7
  %v1255 = vsub.s32 %v1252, %v1254
  %v1256 = vrot.slane %v1248, %v1255
  %v1258 = vunpack.c.l.s4 1934713408
  %v1259 = vunpack.c.0.s8 %v1258
  %v1260 = vlaneseq
  %v1261 = vshrl.u32 %v1260, 7
  %v1262 = vsub.s32 %v1259, %v1261
  %v1263 = vrot.slane %v1249, %v1262
  %v1264 = vcombine.low %v1199, %v1215
  %v1265 = vcombine.high %v1199, %v1215
  %v1267 = vunpack.c.l.s4 1934713408
  %v1268 = vunpack.c.0.s8 %v1267
  %v1269 = vlaneseq
  %v1270 = vshrl.u32 %v1269, 7
  %v1271 = vsub.s32 %v1268, %v1270
  %v1272 = vrot.slane %v1264, %v1271
  %v1274 = vunpack.c.l.s4 1934713408
  %v1275 = vunpack.c.0.s8 %v1274
  %v1276 = vlaneseq
  %v1277 = vshrl.u32 %v1276, 7
  %v1278 = vsub.s32 %v1275, %v1277
  %v1279 = vrot.slane %v1265, %v1278
  %v1280 = vcombine.low %v1224, %v1240
  %v1281 = vcombine.high %v1224, %v1240
  %v1283 = vunpack.c.l.s4 1934713408
  %v1284 = vunpack.c.0.s8 %v1283
  %v1285 = vlaneseq
  %v1286 = vshrl.u32 %v1285, 7
  %v1287 = vsub.s32 %v1284, %v1286
  %v1288 = vrot.slane %v1280, %v1287
  %v1290 = vunpack.c.l.s4 1934713408
  %v1291 = vunpack.c.0.s8 %v1290
  %v1292 = vlaneseq
  %v1293 = vshrl.u32 %v1292, 7
  %v1294 = vsub.s32 %v1291, %v1293
  %v1295 = vrot.slane %v1281, %v1294
  %v1296 = vcombine.low %v1231, %v1247
  %v1297 = vcombine.high %v1231, %v1247
  %v1299 = vunpack.c.l.s4 1934713408
  %v1300 = vunpack.c.0.s8 %v1299
  %v1301 = vlaneseq
  %v1302 = vshrl.u32 %v1301, 7
  %v1303 = vsub.s32 %v1300, %v1302
  %v1304 = vrot.slane %v1296, %v1303
  %v1306 = vunpack.c.l.s4 1934713408
  %v1307 = vunpack.c.0.s8 %v1306
  %v1308 = vlaneseq
  %v1309 = vshrl.u32 %v1308, 7
  %v1310 = vsub.s32 %v1307, %v1309
  %v1311 = vrot.slane %v1297, %v1310
  %v1312 = vcombine.low %v1256, %v1288
  %v1313 = vcombine.high %v1256, %v1288
  %v1314 = vcombine.low %v1263, %v1295
  %v1315 = vcombine.high %v1263, %v1295
  %v1316 = vcombine.low %v1272, %v1304
  %v1317 = vcombine.high %v1272, %v1304
  %v1318 = vcombine.low %v1279, %v1311
  %v1319 = vcombine.high %v1279, %v1311
  %vm1320 = vcmask 15360
  %v1321 = vsel %vm1320, %v360, -inf
  %1322 = vmax.xlane.f32.xlu0 %v1321
  %v1323 = vpop.xlane.xlu0 %1322
  %v1324 = vsel %vm1320, %v361, -inf
  %1325 = vmax.xlane.f32.xlu0 %v1324
  %v1326 = vpop.xlane.xlu0 %1325
  %v1327 = vsel %vm1320, %v362, -inf
  %1328 = vmax.xlane.f32.xlu0 %v1327
  %v1329 = vpop.xlane.xlu0 %1328
  %v1330 = vsel %vm1320, %v363, -inf
  %1331 = vmax.xlane.f32.xlu0 %v1330
  %v1332 = vpop.xlane.xlu0 %1331
  %v1333 = vsel %vm1320, %v364, -inf
  %1334 = vmax.xlane.f32.xlu0 %v1333
  %v1335 = vpop.xlane.xlu0 %1334
  %v1336 = vsel %vm1320, %v365, -inf
  %1337 = vmax.xlane.f32.xlu0 %v1336
  %v1338 = vpop.xlane.xlu0 %1337
  %v1339 = vsel %vm1320, %v366, -inf
  %1340 = vmax.xlane.f32.xlu0 %v1339
  %v1341 = vpop.xlane.xlu0 %1340
  %v1342 = vsel %vm1320, %v367, -inf
  %1343 = vmax.xlane.f32.xlu0 %v1342
  %v1344 = vpop.xlane.xlu0 %1343
  %v1345 = vsel %vm1320, %v496, -inf
  %1346 = vmax.xlane.f32.xlu0 %v1345
  %v1347 = vpop.xlane.xlu0 %1346
  %v1348 = vsel %vm1320, %v497, -inf
  %1349 = vmax.xlane.f32.xlu0 %v1348
  %v1350 = vpop.xlane.xlu0 %1349
  %v1351 = vsel %vm1320, %v498, -inf
  %1352 = vmax.xlane.f32.xlu0 %v1351
  %v1353 = vpop.xlane.xlu0 %1352
  %v1354 = vsel %vm1320, %v499, -inf
  %1355 = vmax.xlane.f32.xlu0 %v1354
  %v1356 = vpop.xlane.xlu0 %1355
  %v1357 = vsel %vm1320, %v500, -inf
  %1358 = vmax.xlane.f32.xlu0 %v1357
  %v1359 = vpop.xlane.xlu0 %1358
  %v1360 = vsel %vm1320, %v501, -inf
  %1361 = vmax.xlane.f32.xlu0 %v1360
  %v1362 = vpop.xlane.xlu0 %1361
  %v1363 = vsel %vm1320, %v502, -inf
  %1364 = vmax.xlane.f32.xlu0 %v1363
  %v1365 = vpop.xlane.xlu0 %1364
  %v1366 = vsel %vm1320, %v503, -inf
  %1367 = vmax.xlane.f32.xlu0 %v1366
  %v1368 = vpop.xlane.xlu0 %1367
  %v1369 = vsel %vm1320, %v632, -inf
  %1370 = vmax.xlane.f32.xlu0 %v1369
  %v1371 = vpop.xlane.xlu0 %1370
  %v1372 = vsel %vm1320, %v633, -inf
  %1373 = vmax.xlane.f32.xlu0 %v1372
  %v1374 = vpop.xlane.xlu0 %1373
  %v1375 = vsel %vm1320, %v634, -inf
  %1376 = vmax.xlane.f32.xlu0 %v1375
  %v1377 = vpop.xlane.xlu0 %1376
  %v1378 = vsel %vm1320, %v635, -inf
  %1379 = vmax.xlane.f32.xlu0 %v1378
  %v1380 = vpop.xlane.xlu0 %1379
  %v1381 = vsel %vm1320, %v636, -inf
  %1382 = vmax.xlane.f32.xlu0 %v1381
  %v1383 = vpop.xlane.xlu0 %1382
  %v1384 = vsel %vm1320, %v637, -inf
  %1385 = vmax.xlane.f32.xlu0 %v1384
  %v1386 = vpop.xlane.xlu0 %1385
  %v1387 = vsel %vm1320, %v638, -inf
  %1388 = vmax.xlane.f32.xlu0 %v1387
  %v1389 = vpop.xlane.xlu0 %1388
  %v1390 = vsel %vm1320, %v639, -inf
  %1391 = vmax.xlane.f32.xlu0 %v1390
  %v1392 = vpop.xlane.xlu0 %1391
  %v1393 = vsel %vm1320, %v768, -inf
  %1394 = vmax.xlane.f32.xlu0 %v1393
  %v1395 = vpop.xlane.xlu0 %1394
  %v1396 = vsel %vm1320, %v769, -inf
  %1397 = vmax.xlane.f32.xlu0 %v1396
  %v1398 = vpop.xlane.xlu0 %1397
  %v1399 = vsel %vm1320, %v770, -inf
  %1400 = vmax.xlane.f32.xlu0 %v1399
  %v1401 = vpop.xlane.xlu0 %1400
  %v1402 = vsel %vm1320, %v771, -inf
  %1403 = vmax.xlane.f32.xlu0 %v1402
  %v1404 = vpop.xlane.xlu0 %1403
  %v1405 = vsel %vm1320, %v772, -inf
  %1406 = vmax.xlane.f32.xlu0 %v1405
  %v1407 = vpop.xlane.xlu0 %1406
  %v1408 = vsel %vm1320, %v773, -inf
  %1409 = vmax.xlane.f32.xlu0 %v1408
  %v1410 = vpop.xlane.xlu0 %1409
  %v1411 = vsel %vm1320, %v774, -inf
  %1412 = vmax.xlane.f32.xlu0 %v1411
  %v1413 = vpop.xlane.xlu0 %1412
  %v1414 = vsel %vm1320, %v775, -inf
  %1415 = vmax.xlane.f32.xlu0 %v1414
  %v1416 = vpop.xlane.xlu0 %1415
  %v1417 = vsel %vm1320, %v904, -inf
  %1418 = vmax.xlane.f32.xlu0 %v1417
  %v1419 = vpop.xlane.xlu0 %1418
  %v1420 = vsel %vm1320, %v905, -inf
  %1421 = vmax.xlane.f32.xlu0 %v1420
  %v1422 = vpop.xlane.xlu0 %1421
  %v1423 = vsel %vm1320, %v906, -inf
  %1424 = vmax.xlane.f32.xlu0 %v1423
  %v1425 = vpop.xlane.xlu0 %1424
  %v1426 = vsel %vm1320, %v907, -inf
  %1427 = vmax.xlane.f32.xlu0 %v1426
  %v1428 = vpop.xlane.xlu0 %1427
  %v1429 = vsel %vm1320, %v908, -inf
  %1430 = vmax.xlane.f32.xlu0 %v1429
  %v1431 = vpop.xlane.xlu0 %1430
  %v1432 = vsel %vm1320, %v909, -inf
  %1433 = vmax.xlane.f32.xlu0 %v1432
  %v1434 = vpop.xlane.xlu0 %1433
  %v1435 = vsel %vm1320, %v910, -inf
  %1436 = vmax.xlane.f32.xlu0 %v1435
  %v1437 = vpop.xlane.xlu0 %1436
  %v1438 = vsel %vm1320, %v911, -inf
  %1439 = vmax.xlane.f32.xlu0 %v1438
  %v1440 = vpop.xlane.xlu0 %1439
  %v1441 = vsel %vm1320, %v1040, -inf
  %1442 = vmax.xlane.f32.xlu0 %v1441
  %v1443 = vpop.xlane.xlu0 %1442
  %v1444 = vsel %vm1320, %v1041, -inf
  %1445 = vmax.xlane.f32.xlu0 %v1444
  %v1446 = vpop.xlane.xlu0 %1445
  %v1447 = vsel %vm1320, %v1042, -inf
  %1448 = vmax.xlane.f32.xlu0 %v1447
  %v1449 = vpop.xlane.xlu0 %1448
  %v1450 = vsel %vm1320, %v1043, -inf
  %1451 = vmax.xlane.f32.xlu0 %v1450
  %v1452 = vpop.xlane.xlu0 %1451
  %v1453 = vsel %vm1320, %v1044, -inf
  %1454 = vmax.xlane.f32.xlu0 %v1453
  %v1455 = vpop.xlane.xlu0 %1454
  %v1456 = vsel %vm1320, %v1045, -inf
  %1457 = vmax.xlane.f32.xlu0 %v1456
  %v1458 = vpop.xlane.xlu0 %1457
  %v1459 = vsel %vm1320, %v1046, -inf
  %1460 = vmax.xlane.f32.xlu0 %v1459
  %v1461 = vpop.xlane.xlu0 %1460
  %v1462 = vsel %vm1320, %v1047, -inf
  %1463 = vmax.xlane.f32.xlu0 %v1462
  %v1464 = vpop.xlane.xlu0 %1463
  %v1465 = vsel %vm1320, %v1176, -inf
  %1466 = vmax.xlane.f32.xlu0 %v1465
  %v1467 = vpop.xlane.xlu0 %1466
  %v1468 = vsel %vm1320, %v1177, -inf
  %1469 = vmax.xlane.f32.xlu0 %v1468
  %v1470 = vpop.xlane.xlu0 %1469
  %v1471 = vsel %vm1320, %v1178, -inf
  %1472 = vmax.xlane.f32.xlu0 %v1471
  %v1473 = vpop.xlane.xlu0 %1472
  %v1474 = vsel %vm1320, %v1179, -inf
  %1475 = vmax.xlane.f32.xlu0 %v1474
  %v1476 = vpop.xlane.xlu0 %1475
  %v1477 = vsel %vm1320, %v1180, -inf
  %1478 = vmax.xlane.f32.xlu0 %v1477
  %v1479 = vpop.xlane.xlu0 %1478
  %v1480 = vsel %vm1320, %v1181, -inf
  %1481 = vmax.xlane.f32.xlu0 %v1480
  %v1482 = vpop.xlane.xlu0 %1481
  %v1483 = vsel %vm1320, %v1182, -inf
  %1484 = vmax.xlane.f32.xlu0 %v1483
  %v1485 = vpop.xlane.xlu0 %1484
  %v1486 = vsel %vm1320, %v1183, -inf
  %1487 = vmax.xlane.f32.xlu0 %v1486
  %v1488 = vpop.xlane.xlu0 %1487
  %v1489 = vsel %vm1320, %v1312, -inf
  %1490 = vmax.xlane.f32.xlu0 %v1489
  %v1491 = vpop.xlane.xlu0 %1490
  %v1492 = vsel %vm1320, %v1313, -inf
  %1493 = vmax.xlane.f32.xlu0 %v1492
  %v1494 = vpop.xlane.xlu0 %1493
  %v1495 = vsel %vm1320, %v1314, -inf
  %1496 = vmax.xlane.f32.xlu0 %v1495
  %v1497 = vpop.xlane.xlu0 %1496
  %v1498 = vsel %vm1320, %v1315, -inf
  %1499 = vmax.xlane.f32.xlu0 %v1498
  %v1500 = vpop.xlane.xlu0 %1499
  %v1501 = vsel %vm1320, %v1316, -inf
  %1502 = vmax.xlane.f32.xlu0 %v1501
  %v1503 = vpop.xlane.xlu0 %1502
  %v1504 = vsel %vm1320, %v1317, -inf
  %1505 = vmax.xlane.f32.xlu0 %v1504
  %v1506 = vpop.xlane.xlu0 %1505
  %v1507 = vsel %vm1320, %v1318, -inf
  %1508 = vmax.xlane.f32.xlu0 %v1507
  %v1509 = vpop.xlane.xlu0 %1508
  %v1510 = vsel %vm1320, %v1319, -inf
  %1511 = vmax.xlane.f32.xlu0 %v1510
  %v1512 = vpop.xlane.xlu0 %1511
  %v1577 = vlaneseq
  %v1578 = vand.u32 %v1577, 127
  %v1579 = vlaneseq
  %v1580 = vshrl.u32 %v1579, 7
  %v1581 = vsub.s32 %v1578, %v1580
  %v1582 = vrot.slane %v1323, %v1581
  %v1583 = vlaneseq
  %v1584 = vshrl.u32 %v1583, 7
  %v1585 = vsub.s32 %v1578, %v1584
  %v1586 = vrot.slane %v1326, %v1585
  %v1587 = vlaneseq
  %v1588 = vshrl.u32 %v1587, 7
  %v1589 = vsub.s32 %v1578, %v1588
  %v1590 = vrot.slane %v1329, %v1589
  %v1591 = vlaneseq
  %v1592 = vshrl.u32 %v1591, 7
  %v1593 = vsub.s32 %v1578, %v1592
  %v1594 = vrot.slane %v1332, %v1593
  %v1595 = vlaneseq
  %v1596 = vshrl.u32 %v1595, 7
  %v1597 = vsub.s32 %v1578, %v1596
  %v1598 = vrot.slane %v1335, %v1597
  %v1599 = vlaneseq
  %v1600 = vshrl.u32 %v1599, 7
  %v1601 = vsub.s32 %v1578, %v1600
  %v1602 = vrot.slane %v1338, %v1601
  %v1603 = vlaneseq
  %v1604 = vshrl.u32 %v1603, 7
  %v1605 = vsub.s32 %v1578, %v1604
  %v1606 = vrot.slane %v1341, %v1605
  %v1607 = vlaneseq
  %v1608 = vshrl.u32 %v1607, 7
  %v1609 = vsub.s32 %v1578, %v1608
  %v1610 = vrot.slane %v1344, %v1609
  %v1611 = vlaneseq
  %v1612 = vshrl.u32 %v1611, 7
  %v1613 = vsub.s32 %v1578, %v1612
  %v1614 = vrot.slane %v1347, %v1613
  %v1615 = vlaneseq
  %v1616 = vshrl.u32 %v1615, 7
  %v1617 = vsub.s32 %v1578, %v1616
  %v1618 = vrot.slane %v1350, %v1617
  %v1619 = vlaneseq
  %v1620 = vshrl.u32 %v1619, 7
  %v1621 = vsub.s32 %v1578, %v1620
  %v1622 = vrot.slane %v1353, %v1621
  %v1623 = vlaneseq
  %v1624 = vshrl.u32 %v1623, 7
  %v1625 = vsub.s32 %v1578, %v1624
  %v1626 = vrot.slane %v1356, %v1625
  %v1627 = vlaneseq
  %v1628 = vshrl.u32 %v1627, 7
  %v1629 = vsub.s32 %v1578, %v1628
  %v1630 = vrot.slane %v1359, %v1629
  %v1631 = vlaneseq
  %v1632 = vshrl.u32 %v1631, 7
  %v1633 = vsub.s32 %v1578, %v1632
  %v1634 = vrot.slane %v1362, %v1633
  %v1635 = vlaneseq
  %v1636 = vshrl.u32 %v1635, 7
  %v1637 = vsub.s32 %v1578, %v1636
  %v1638 = vrot.slane %v1365, %v1637
  %v1639 = vlaneseq
  %v1640 = vshrl.u32 %v1639, 7
  %v1641 = vsub.s32 %v1578, %v1640
  %v1642 = vrot.slane %v1368, %v1641
  %v1643 = vlaneseq
  %v1644 = vshrl.u32 %v1643, 7
  %v1645 = vsub.s32 %v1578, %v1644
  %v1646 = vrot.slane %v1371, %v1645
  %v1647 = vlaneseq
  %v1648 = vshrl.u32 %v1647, 7
  %v1649 = vsub.s32 %v1578, %v1648
  %v1650 = vrot.slane %v1374, %v1649
  %v1651 = vlaneseq
  %v1652 = vshrl.u32 %v1651, 7
  %v1653 = vsub.s32 %v1578, %v1652
  %v1654 = vrot.slane %v1377, %v1653
  %v1655 = vlaneseq
  %v1656 = vshrl.u32 %v1655, 7
  %v1657 = vsub.s32 %v1578, %v1656
  %v1658 = vrot.slane %v1380, %v1657
  %v1659 = vlaneseq
  %v1660 = vshrl.u32 %v1659, 7
  %v1661 = vsub.s32 %v1578, %v1660
  %v1662 = vrot.slane %v1383, %v1661
  %v1663 = vlaneseq
  %v1664 = vshrl.u32 %v1663, 7
  %v1665 = vsub.s32 %v1578, %v1664
  %v1666 = vrot.slane %v1386, %v1665
  %v1667 = vlaneseq
  %v1668 = vshrl.u32 %v1667, 7
  %v1669 = vsub.s32 %v1578, %v1668
  %v1670 = vrot.slane %v1389, %v1669
  %v1671 = vlaneseq
  %v1672 = vshrl.u32 %v1671, 7
  %v1673 = vsub.s32 %v1578, %v1672
  %v1674 = vrot.slane %v1392, %v1673
  %v1675 = vlaneseq
  %v1676 = vshrl.u32 %v1675, 7
  %v1677 = vsub.s32 %v1578, %v1676
  %v1678 = vrot.slane %v1395, %v1677
  %v1679 = vlaneseq
  %v1680 = vshrl.u32 %v1679, 7
  %v1681 = vsub.s32 %v1578, %v1680
  %v1682 = vrot.slane %v1398, %v1681
  %v1683 = vlaneseq
  %v1684 = vshrl.u32 %v1683, 7
  %v1685 = vsub.s32 %v1578, %v1684
  %v1686 = vrot.slane %v1401, %v1685
  %v1687 = vlaneseq
  %v1688 = vshrl.u32 %v1687, 7
  %v1689 = vsub.s32 %v1578, %v1688
  %v1690 = vrot.slane %v1404, %v1689
  %v1691 = vlaneseq
  %v1692 = vshrl.u32 %v1691, 7
  %v1693 = vsub.s32 %v1578, %v1692
  %v1694 = vrot.slane %v1407, %v1693
  %v1695 = vlaneseq
  %v1696 = vshrl.u32 %v1695, 7
  %v1697 = vsub.s32 %v1578, %v1696
  %v1698 = vrot.slane %v1410, %v1697
  %v1699 = vlaneseq
  %v1700 = vshrl.u32 %v1699, 7
  %v1701 = vsub.s32 %v1578, %v1700
  %v1702 = vrot.slane %v1413, %v1701
  %v1703 = vlaneseq
  %v1704 = vshrl.u32 %v1703, 7
  %v1705 = vsub.s32 %v1578, %v1704
  %v1706 = vrot.slane %v1416, %v1705
  %v1707 = vlaneseq
  %v1708 = vshrl.u32 %v1707, 7
  %v1709 = vsub.s32 %v1578, %v1708
  %v1710 = vrot.slane %v1419, %v1709
  %v1711 = vlaneseq
  %v1712 = vshrl.u32 %v1711, 7
  %v1713 = vsub.s32 %v1578, %v1712
  %v1714 = vrot.slane %v1422, %v1713
  %v1715 = vlaneseq
  %v1716 = vshrl.u32 %v1715, 7
  %v1717 = vsub.s32 %v1578, %v1716
  %v1718 = vrot.slane %v1425, %v1717
  %v1719 = vlaneseq
  %v1720 = vshrl.u32 %v1719, 7
  %v1721 = vsub.s32 %v1578, %v1720
  %v1722 = vrot.slane %v1428, %v1721
  %v1723 = vlaneseq
  %v1724 = vshrl.u32 %v1723, 7
  %v1725 = vsub.s32 %v1578, %v1724
  %v1726 = vrot.slane %v1431, %v1725
  %v1727 = vlaneseq
  %v1728 = vshrl.u32 %v1727, 7
  %v1729 = vsub.s32 %v1578, %v1728
  %v1730 = vrot.slane %v1434, %v1729
  %v1731 = vlaneseq
  %v1732 = vshrl.u32 %v1731, 7
  %v1733 = vsub.s32 %v1578, %v1732
  %v1734 = vrot.slane %v1437, %v1733
  %v1735 = vlaneseq
  %v1736 = vshrl.u32 %v1735, 7
  %v1737 = vsub.s32 %v1578, %v1736
  %v1738 = vrot.slane %v1440, %v1737
  %v1739 = vlaneseq
  %v1740 = vshrl.u32 %v1739, 7
  %v1741 = vsub.s32 %v1578, %v1740
  %v1742 = vrot.slane %v1443, %v1741
  %v1743 = vlaneseq
  %v1744 = vshrl.u32 %v1743, 7
  %v1745 = vsub.s32 %v1578, %v1744
  %v1746 = vrot.slane %v1446, %v1745
  %v1747 = vlaneseq
  %v1748 = vshrl.u32 %v1747, 7
  %v1749 = vsub.s32 %v1578, %v1748
  %v1750 = vrot.slane %v1449, %v1749
  %v1751 = vlaneseq
  %v1752 = vshrl.u32 %v1751, 7
  %v1753 = vsub.s32 %v1578, %v1752
  %v1754 = vrot.slane %v1452, %v1753
  %v1755 = vlaneseq
  %v1756 = vshrl.u32 %v1755, 7
  %v1757 = vsub.s32 %v1578, %v1756
  %v1758 = vrot.slane %v1455, %v1757
  %v1759 = vlaneseq
  %v1760 = vshrl.u32 %v1759, 7
  %v1761 = vsub.s32 %v1578, %v1760
  %v1762 = vrot.slane %v1458, %v1761
  %v1763 = vlaneseq
  %v1764 = vshrl.u32 %v1763, 7
  %v1765 = vsub.s32 %v1578, %v1764
  %v1766 = vrot.slane %v1461, %v1765
  %v1767 = vlaneseq
  %v1768 = vshrl.u32 %v1767, 7
  %v1769 = vsub.s32 %v1578, %v1768
  %v1770 = vrot.slane %v1464, %v1769
  %v1771 = vlaneseq
  %v1772 = vshrl.u32 %v1771, 7
  %v1773 = vsub.s32 %v1578, %v1772
  %v1774 = vrot.slane %v1467, %v1773
  %v1775 = vlaneseq
  %v1776 = vshrl.u32 %v1775, 7
  %v1777 = vsub.s32 %v1578, %v1776
  %v1778 = vrot.slane %v1470, %v1777
  %v1779 = vlaneseq
  %v1780 = vshrl.u32 %v1779, 7
  %v1781 = vsub.s32 %v1578, %v1780
  %v1782 = vrot.slane %v1473, %v1781
  %v1783 = vlaneseq
  %v1784 = vshrl.u32 %v1783, 7
  %v1785 = vsub.s32 %v1578, %v1784
  %v1786 = vrot.slane %v1476, %v1785
  %v1787 = vlaneseq
  %v1788 = vshrl.u32 %v1787, 7
  %v1789 = vsub.s32 %v1578, %v1788
  %v1790 = vrot.slane %v1479, %v1789
  %v1791 = vlaneseq
  %v1792 = vshrl.u32 %v1791, 7
  %v1793 = vsub.s32 %v1578, %v1792
  %v1794 = vrot.slane %v1482, %v1793
  %v1795 = vlaneseq
  %v1796 = vshrl.u32 %v1795, 7
  %v1797 = vsub.s32 %v1578, %v1796
  %v1798 = vrot.slane %v1485, %v1797
  %v1799 = vlaneseq
  %v1800 = vshrl.u32 %v1799, 7
  %v1801 = vsub.s32 %v1578, %v1800
  %v1802 = vrot.slane %v1488, %v1801
  %v1803 = vlaneseq
  %v1804 = vshrl.u32 %v1803, 7
  %v1805 = vsub.s32 %v1578, %v1804
  %v1806 = vrot.slane %v1491, %v1805
  %v1807 = vlaneseq
  %v1808 = vshrl.u32 %v1807, 7
  %v1809 = vsub.s32 %v1578, %v1808
  %v1810 = vrot.slane %v1494, %v1809
  %v1811 = vlaneseq
  %v1812 = vshrl.u32 %v1811, 7
  %v1813 = vsub.s32 %v1578, %v1812
  %v1814 = vrot.slane %v1497, %v1813
  %v1815 = vlaneseq
  %v1816 = vshrl.u32 %v1815, 7
  %v1817 = vsub.s32 %v1578, %v1816
  %v1818 = vrot.slane %v1500, %v1817
  %v1819 = vlaneseq
  %v1820 = vshrl.u32 %v1819, 7
  %v1821 = vsub.s32 %v1578, %v1820
  %v1822 = vrot.slane %v1503, %v1821
  %v1823 = vlaneseq
  %v1824 = vshrl.u32 %v1823, 7
  %v1825 = vsub.s32 %v1578, %v1824
  %v1826 = vrot.slane %v1506, %v1825
  %v1827 = vlaneseq
  %v1828 = vshrl.u32 %v1827, 7
  %v1829 = vsub.s32 %v1578, %v1828
  %v1830 = vrot.slane %v1509, %v1829
  %v1831 = vlaneseq
  %v1832 = vshrl.u32 %v1831, 7
  %v1833 = vsub.s32 %v1578, %v1832
  %v1834 = vrot.slane %v1512, %v1833
  %vm1835 = vcmask 1041409
  %v1836 = vsel %vm1835, %v1586, %v1582
  %vm1837 = vcmask 1042434
  %v1838 = vsel %vm1837, %v1590, %v1836
  %vm1839 = vcmask 1043459
  %v1840 = vsel %vm1839, %v1594, %v1838
  %vm1841 = vcmask 1044484
  %v1842 = vsel %vm1841, %v1598, %v1840
  %vm1843 = vcmask 1045509
  %v1844 = vsel %vm1843, %v1602, %v1842
  %vm1845 = vcmask 1046534
  %v1846 = vsel %vm1845, %v1606, %v1844
  %vm1847 = vcmask 1047559
  %v1848 = vsel %vm1847, %v1610, %v1846
  %v1849 = vsel %vm1835, %v1618, %v1614
  %v1850 = vsel %vm1837, %v1622, %v1849
  %v1851 = vsel %vm1839, %v1626, %v1850
  %v1852 = vsel %vm1841, %v1630, %v1851
  %v1853 = vsel %vm1843, %v1634, %v1852
  %v1854 = vsel %vm1845, %v1638, %v1853
  %v1855 = vsel %vm1847, %v1642, %v1854
  %v1856 = vsel %vm1835, %v1650, %v1646
  %v1857 = vsel %vm1837, %v1654, %v1856
  %v1858 = vsel %vm1839, %v1658, %v1857
  %v1859 = vsel %vm1841, %v1662, %v1858
  %v1860 = vsel %vm1843, %v1666, %v1859
  %v1861 = vsel %vm1845, %v1670, %v1860
  %v1862 = vsel %vm1847, %v1674, %v1861
  %v1863 = vsel %vm1835, %v1682, %v1678
  %v1864 = vsel %vm1837, %v1686, %v1863
  %v1865 = vsel %vm1839, %v1690, %v1864
  %v1866 = vsel %vm1841, %v1694, %v1865
  %v1867 = vsel %vm1843, %v1698, %v1866
  %v1868 = vsel %vm1845, %v1702, %v1867
  %v1869 = vsel %vm1847, %v1706, %v1868
  %v1870 = vsel %vm1835, %v1714, %v1710
  %v1871 = vsel %vm1837, %v1718, %v1870
  %v1872 = vsel %vm1839, %v1722, %v1871
  %v1873 = vsel %vm1841, %v1726, %v1872
  %v1874 = vsel %vm1843, %v1730, %v1873
  %v1875 = vsel %vm1845, %v1734, %v1874
  %v1876 = vsel %vm1847, %v1738, %v1875
  %v1877 = vsel %vm1835, %v1746, %v1742
  %v1878 = vsel %vm1837, %v1750, %v1877
  %v1879 = vsel %vm1839, %v1754, %v1878
  %v1880 = vsel %vm1841, %v1758, %v1879
  %v1881 = vsel %vm1843, %v1762, %v1880
  %v1882 = vsel %vm1845, %v1766, %v1881
  %v1883 = vsel %vm1847, %v1770, %v1882
  %v1884 = vsel %vm1835, %v1778, %v1774
  %v1885 = vsel %vm1837, %v1782, %v1884
  %v1886 = vsel %vm1839, %v1786, %v1885
  %v1887 = vsel %vm1841, %v1790, %v1886
  %v1888 = vsel %vm1843, %v1794, %v1887
  %v1889 = vsel %vm1845, %v1798, %v1888
  %v1890 = vsel %vm1847, %v1802, %v1889
  %v1891 = vsel %vm1835, %v1810, %v1806
  %v1892 = vsel %vm1837, %v1814, %v1891
  %v1893 = vsel %vm1839, %v1818, %v1892
  %v1894 = vsel %vm1841, %v1822, %v1893
  %v1895 = vsel %vm1843, %v1826, %v1894
  %v1896 = vsel %vm1845, %v1830, %v1895
  %v1897 = vsel %vm1847, %v1834, %v1896
  %vm1906 = vcmask 64512
  %1907 = vst.msk [vmem:[%s1] sm:$0xff] %vm1906, %v1848
  %1908 = vst.msk [vmem:[%s1 + $0x8] sm:$0xff] %vm1906, %v1855
  %1909 = vst.msk [vmem:[%s1 + $0x10] sm:$0xff] %vm1906, %v1862
  %1910 = vst.msk [vmem:[%s1 + $0x18] sm:$0xff] %vm1906, %v1869
  %1911 = vst.msk [vmem:[%s1 + $0x20] sm:$0xff] %vm1906, %v1876
  %1912 = vst.msk [vmem:[%s1 + $0x28] sm:$0xff] %vm1906, %v1883
  %1913 = vst.msk [vmem:[%s1 + $0x30] sm:$0xff] %vm1906, %v1890
  %1914 = vst.msk [vmem:[%s1 + $0x38] sm:$0xff] %vm1906, %v1897
  // Predicated region
  $region6: #{tpu_custom_call.1} parent=0 // pred_check
    _
  $region7: #{tpu_custom_call.1} parent=0 // pred_check_branch
    %1916 = sbr.rel (0) target = $region9
  $region8: #{tpu_custom_call.1} parent=0 // pred_region
    _
  $region9: #{tpu_custom_call.1} parent=0 // pred_fallthru
    _
  // Predicated region
  $region10: #{tpu_custom_call.1} parent=0 // pred_check
    _
  $region11: #{tpu_custom_call.1} parent=0 // pred_check_branch
    %1918 = sbr.rel (0) target = $region13
  $region12: #{tpu_custom_call.1} parent=0 // pred_region
    _
  $region13: #{tpu_custom_call.1} parent=0 // pred_fallthru
    _

</llo_original>
